<compile_context>
chip_gen: v6e
topology: v6e:2x2x1
jax: 0.10.0
libtpu: 0.0.40
codegen_flags: <defaults>
</compile_context>

<pallas_src>
import jax
import jax.numpy as jnp
from jax.experimental import pallas as pl
from jax.experimental.pallas import tpu as pltpu

LANE = 128        # lane (last-dim) width
SUB_M = 256       # rows per in-kernel sub-chunk (MXU-friendly)
MAX_TILE_M = 4096  # hard cap on rows per grid step


def _round_up(x, m):
    return (x + m - 1) // m * m


def _vmem_capacity_bytes():
    """Per-core VMEM capacity; conservative fallback if the query fails."""
    try:
        cap = int(pltpu.get_tpu_info().vmem_capacity_bytes)
        if cap > 0:
            return cap
    except Exception:
        pass
    return 64 * 1024 * 1024   # v7x per-TC size: safe lower bound


def _make_mlp_kernel(num_layers, relu_flags, sub_m, num_sub):
    """Fused MLP kernel: all layers applied to one row tile, processed in
    sub_m-row sub-chunks so activations never round-trip through VMEM scratch."""

    def kernel(*refs):
        # refs = (x, w0, b0, w1, b1, ..., w_{L-1}, b_{L-1}, out)
        x_ref = refs[0]
        out_ref = refs[1 + 2 * num_layers]

        def body(s, carry):
            r0 = pl.multiple_of(s * sub_m, sub_m)
            h = x_ref[pl.ds(r0, sub_m), :]            # compute dtype (f32 or bf16)
            for l in range(num_layers):
                w = refs[1 + 2 * l][...]               # (d_in_l, d_out_l), compute dtype
                b = refs[2 + 2 * l][...]               # (1, d_out_l), f32
                acc = jnp.dot(h, w, preferred_element_type=jnp.float32) + b
                if relu_flags[l]:
                    acc = jnp.maximum(acc, 0.0)        # f32 epilogue
                if l != num_layers - 1:
                    h = acc.astype(x_ref.dtype)        # next matmul stays MXU-native
                else:
                    out_ref[pl.ds(r0, sub_m), :] = acc.astype(out_ref.dtype)
            return carry

        jax.lax.fori_loop(0, num_sub, body, 0)

    return kernel


def mlp_pallas(x, weights, biases, relu_flags=None, *, tile_m=None,
               compute_dtype=None, vmem_budget_bytes=None):
    """Run the fused MLP.

    x:          (N, dim_in)
    weights:    list of (d_in_l, d_out_l) arrays
    biases:     list of (d_out_l,) arrays
    relu_flags: per-layer ReLU flags (default: ReLU on all but the last layer)
    """
    num_layers = len(weights)
    if relu_flags is None:
        relu_flags = tuple(l != num_layers - 1 for l in range(num_layers))
    relu_flags = tuple(bool(f) for f in relu_flags)

    N, dim_in = x.shape
    out_dtype = x.dtype
    # Default preserves the PyTorch module's numerics; pass jnp.bfloat16 on v6e/v7x
    # for ~2-3x MXU throughput (accumulation stays f32 inside the kernel).
    if compute_dtype is None:
        compute_dtype = x.dtype
    compute_dtype = jnp.dtype(compute_dtype)

    # ---- pad feature dims to lane-dense multiples of 128 -------------------
    dims = [dim_in] + [int(w.shape[1]) for w in weights]
    dims_p = [_round_up(d, LANE) for d in dims]
    dim_out, dim_out_p = dims[-1], dims_p[-1]

    x_c = x.astype(compute_dtype)
    if dims_p[0] != dim_in:
        x_c = jnp.pad(x_c, ((0, 0), (0, dims_p[0] - dim_in)))

    w_p, b_p = [], []
    for l, (w, b) in enumerate(zip(weights, biases)):
        d_in_l, d_out_l = w.shape
        wp = jnp.pad(w.astype(compute_dtype),
                     ((0, dims_p[l] - d_in_l), (0, dims_p[l + 1] - d_out_l)))
        bp = jnp.pad(b.astype(jnp.float32),
                     (0, dims_p[l + 1] - d_out_l)).reshape(1, -1)
        w_p.append(wp)
        b_p.append(bp)

    # ---- VMEM budget & row-tile sizing --------------------------------------
    cap = _vmem_capacity_bytes()
    if vmem_budget_bytes is None:
        vmem_budget_bytes = int(cap * 0.70)      # ~90 MiB v5e/v6e, ~45 MiB v7x

    c_item = compute_dtype.itemsize
    o_item = jnp.dtype(out_dtype).itemsize
    # Weights/biases are grid-invariant (not re-DMA'd), but the pipeline still
    # allocates 2 buffers per input -> count the real 2x multiplier.
    weight_bytes = (sum(int(w.size) * c_item for w in w_p)
                    + sum(int(b.size) * 4 for b in b_p))
    # In-kernel f32 temporaries (dot output / bias / relu / cast per sub-chunk)
    # plus slack for Mosaic-internal scratch.
    temp_bytes = 4 * SUB_M * max(dims_p) * 4 + (2 << 20)
    fixed_bytes = 2 * weight_bytes + temp_bytes
    per_row = 2 * dims_p[0] * c_item + 2 * dim_out_p * o_item   # double-buffered x / out

    avail = vmem_budget_bytes - fixed_bytes
    if avail < per_row * SUB_M:
        # TODO(synk): weights too large for residency -> fall back to a per-layer
        # streaming (K-split) schedule instead of keeping every layer resident.
        budget_tile = SUB_M
    else:
        budget_tile = min((avail // per_row) // SUB_M * SUB_M, MAX_TILE_M)

    # Cap so every block starts in-bounds; the last block may be partial and
    # Pallas masks its out-of-bounds rows on writeback (no wrapper row pad).
    n_tile_cap = max(SUB_M, (N // SUB_M) * SUB_M)
    if tile_m is None:
        tile_m = budget_tile
    else:
        tile_m = min(_round_up(int(tile_m), SUB_M), budget_tile)
    tile_m = max(SUB_M, min(tile_m, n_tile_cap))
    num_sub = tile_m // SUB_M
    grid = (pl.cdiv(N, tile_m),)

    est = fixed_bytes + tile_m * per_row

    # ---- specs --------------------------------------------------------------
    in_specs = [pl.BlockSpec((tile_m, dims_p[0]), lambda i: (i, 0))]
    for wp, bp in zip(w_p, b_p):
        in_specs.append(pl.BlockSpec(wp.shape, lambda i: (0, 0)))   # resident weight
        in_specs.append(pl.BlockSpec(bp.shape, lambda i: (0, 0)))   # resident bias
    out_spec = pl.BlockSpec((tile_m, dim_out_p), lambda i: (i, 0))

    flops = 2 * N * sum(dims_p[l] * dims_p[l + 1] for l in range(num_layers))
    bytes_accessed = (N * dims_p[0] * c_item + N * dim_out_p * o_item + weight_bytes)
    cost = pl.CostEstimate(flops=int(flops), transcendentals=0,
                           bytes_accessed=int(bytes_accessed))

    # Always raise the scoped-VMEM limit (v5e default is only 16 MiB), with a few
    # MiB of headroom below physical capacity for compiler-internal scratch.
    vmem_limit = int(min(max(est * 5 // 4, 32 * 1024 * 1024),
                         cap - 4 * 1024 * 1024))
    compiler_params = pltpu.CompilerParams(
        dimension_semantics=("parallel",),   # shards row blocks across v7x's 2 TCs
        vmem_limit_bytes=vmem_limit,
    )

    kernel = _make_mlp_kernel(num_layers, relu_flags, SUB_M, num_sub)

    call = pl.pallas_call(
        kernel,
        out_shape=jax.ShapeDtypeStruct((N, dim_out_p), out_dtype),
        grid_spec=pltpu.PrefetchScalarGridSpec(
            num_scalar_prefetch=0,
            grid=grid,
            in_specs=in_specs,
            out_specs=out_spec,
        ),
        compiler_params=compiler_params,
        cost_estimate=cost,
    )

    args = [x_c]
    for wp, bp in zip(w_p, b_p):
        args.append(wp)
        args.append(bp)
    out_padded = call(*args)
    if dim_out_p != dim_out:
        return out_padded[:, :dim_out]
    return out_padded


def init_mlp_params(key, dim_in, dim_out, dim_hidden, num_layers):
    """Deterministic init mimicking nn.Linear (uniform +/- 1/sqrt(fan_in)), with
    the exact per-layer structure of the PyTorch MLP (ReLU on all but the last)."""
    weights, biases, relu_flags = [], [], []
    for l in range(num_layers):
        if l == 0:
            d_in, d_out, relu = dim_in, dim_hidden, True
        elif l != num_layers - 1:
            d_in, d_out, relu = dim_hidden, dim_hidden, True
        else:
            d_in, d_out, relu = dim_hidden, dim_out, False
        key, kw, kb = jax.random.split(key, 3)
        bound = 1.0 / jnp.sqrt(d_in)
        w = jax.random.uniform(kw, (d_in, d_out), jnp.float32, -bound, bound)
        b = jax.random.uniform(kb, (d_out,), jnp.float32, -bound, bound)
        weights.append(w)
        biases.append(b)
        relu_flags.append(relu)
    return weights, biases, tuple(relu_flags)


def mlp_reference(x, weights, biases, relu_flags):
    h = x
    for w, b, relu in zip(weights, biases, relu_flags):
        h = h @ w + b
        if relu:
            h = jnp.maximum(h, 0.0)
    return h


if __name__ == "__main__":
    # Small shapes consistent with MLP(dim_in, dim_out, dim_hidden, num_layers).
    dim_in, dim_out, dim_hidden, num_layers = 32, 16, 64, 3

    key = jax.random.PRNGKey(0)
    key, kx = jax.random.split(key)
    weights, biases, relu_flags = init_mlp_params(
        key, dim_in, dim_out, dim_hidden, num_layers)

    # Case 1: N not a multiple of the row tile -> partial last block, f32.
    N1 = 300
    x1 = jax.random.normal(kx, (N1, dim_in), jnp.float32)
    ref1 = mlp_reference(x1, weights, biases, relu_flags)
    out1 = jax.block_until_ready(
        mlp_pallas(x1, weights, biases, relu_flags, compute_dtype=jnp.float32))
    assert out1.shape == (N1, dim_out)
    assert jnp.allclose(out1, ref1, atol=1e-4, rtol=1e-4), "f32 Pallas MLP mismatch (case 1)"

    # Case 2: larger N -> multi-sub-chunk tile (in-kernel fori_loop) + partial last
    # grid block, auto tile sizing, f32.
    key, kx2 = jax.random.split(key)
    N2 = 1000
    x2 = jax.random.normal(kx2, (N2, dim_in), jnp.float32)
    ref2 = mlp_reference(x2, weights, biases, relu_flags)
    out2 = jax.block_until_ready(
        mlp_pallas(x2, weights, biases, relu_flags, compute_dtype=jnp.float32))
    assert out2.shape == (N2, dim_out)
    assert jnp.allclose(out2, ref2, atol=1e-4, rtol=1e-4), "f32 Pallas MLP mismatch (case 2)"

    # Case 3: bf16 compute path (MXU-native on v6e/v7x), f32 accumulation.
    out_bf16 = jax.block_until_ready(
        mlp_pallas(x1, weights, biases, relu_flags, compute_dtype=jnp.bfloat16))
    assert out_bf16.shape == (N1, dim_out)
    err = jnp.max(jnp.abs(out_bf16.astype(jnp.float32) - ref1))
    scale = jnp.max(jnp.abs(ref1)) + 1e-6
    assert float(err / scale) < 0.1, f"bf16 Pallas MLP error too large: {err}"

    print("KERNEL_OK")
</pallas_src>

<mosaic_0001>
module attributes {stable_mosaic.version = 11 : i64} {
  func.func @kernel(%arg0: i32, %arg1: memref<256x128xf32, #tpu.memory_space<vmem>>, %arg2: memref<128x128xf32, #tpu.memory_space<vmem>>, %arg3: memref<1x128xf32, #tpu.memory_space<vmem>>, %arg4: memref<128x128xf32, #tpu.memory_space<vmem>>, %arg5: memref<1x128xf32, #tpu.memory_space<vmem>>, %arg6: memref<128x128xf32, #tpu.memory_space<vmem>>, %arg7: memref<1x128xf32, #tpu.memory_space<vmem>>, %arg8: memref<256x128xf32, #tpu.memory_space<vmem>>) attributes {dimension_semantics = [#tpu.dimension_semantics<parallel>], iteration_bounds = array<i64: 2>, scalar_prefetch = 0 : i64, scratch_operands = 0 : i64, tpu.core_type = #tpu.core_type<tc>, window_params = [{transform_indices = @transform_0, window_bounds = array<i64: 256, 128>}, {pipeline_mode = #tpu.pipeline_mode<synchronous>, transform_indices = @transform_1, window_bounds = array<i64: 128, 128>}, {pipeline_mode = #tpu.pipeline_mode<synchronous>, transform_indices = @transform_2, window_bounds = array<i64: 1, 128>}, {pipeline_mode = #tpu.pipeline_mode<synchronous>, transform_indices = @transform_3, window_bounds = array<i64: 128, 128>}, {pipeline_mode = #tpu.pipeline_mode<synchronous>, transform_indices = @transform_4, window_bounds = array<i64: 1, 128>}, {pipeline_mode = #tpu.pipeline_mode<synchronous>, transform_indices = @transform_5, window_bounds = array<i64: 128, 128>}, {pipeline_mode = #tpu.pipeline_mode<synchronous>, transform_indices = @transform_6, window_bounds = array<i64: 1, 128>}, {transform_indices = @transform_7, window_bounds = array<i64: 256, 128>}]} {
    %c0_i32 = arith.constant 0 : i32
    %c256_i32 = arith.constant 256 : i32
    %0 = arith.muli %c0_i32, %c256_i32 : i32
    %1 = tpu.assume_multiple %0, 256 : i32
    %2 = arith.index_cast %1 : i32 to index
    %c0 = arith.constant 0 : index
    %3 = vector.load %arg1[%2, %c0] : memref<256x128xf32, #tpu.memory_space<vmem>>, vector<256x128xf32>
    %c0_0 = arith.constant 0 : index
    %c0_1 = arith.constant 0 : index
    %4 = vector.load %arg2[%c0_0, %c0_1] : memref<128x128xf32, #tpu.memory_space<vmem>>, vector<128x128xf32>
    %c0_2 = arith.constant 0 : index
    %c0_3 = arith.constant 0 : index
    %5 = vector.load %arg3[%c0_2, %c0_3] : memref<1x128xf32, #tpu.memory_space<vmem>>, vector<1x128xf32>
    %cst = arith.constant dense<0.000000e+00> : vector<256x128xf32>
    %6 = tpu.matmul %3, %4, %cst {dimension_numbers = #tpu.dot_dimension_numbers<[1], [0], [0], [1], [0, 0, 1, 1], [], []>} : vector<256x128xf32>, vector<128x128xf32>, vector<256x128xf32> -> vector<256x128xf32>
    %7 = vector.broadcast %5 : vector<1x128xf32> to vector<256x128xf32>
    %8 = arith.addf %6, %7 : vector<256x128xf32>
    %cst_4 = arith.constant 0.000000e+00 : f32
    %9 = vector.broadcast %cst_4 : f32 to vector<256x128xf32>
    %10 = arith.maximumf %8, %9 : vector<256x128xf32>
    %c0_5 = arith.constant 0 : index
    %c0_6 = arith.constant 0 : index
    %11 = vector.load %arg4[%c0_5, %c0_6] : memref<128x128xf32, #tpu.memory_space<vmem>>, vector<128x128xf32>
    %c0_7 = arith.constant 0 : index
    %c0_8 = arith.constant 0 : index
    %12 = vector.load %arg5[%c0_7, %c0_8] : memref<1x128xf32, #tpu.memory_space<vmem>>, vector<1x128xf32>
    %cst_9 = arith.constant dense<0.000000e+00> : vector<256x128xf32>
    %13 = tpu.matmul %10, %11, %cst_9 {dimension_numbers = #tpu.dot_dimension_numbers<[1], [0], [0], [1], [0, 0, 1, 1], [], []>} : vector<256x128xf32>, vector<128x128xf32>, vector<256x128xf32> -> vector<256x128xf32>
    %14 = vector.broadcast %12 : vector<1x128xf32> to vector<256x128xf32>
    %15 = arith.addf %13, %14 : vector<256x128xf32>
    %cst_10 = arith.constant 0.000000e+00 : f32
    %16 = vector.broadcast %cst_10 : f32 to vector<256x128xf32>
    %17 = arith.maximumf %15, %16 : vector<256x128xf32>
    %c0_11 = arith.constant 0 : index
    %c0_12 = arith.constant 0 : index
    %18 = vector.load %arg6[%c0_11, %c0_12] : memref<128x128xf32, #tpu.memory_space<vmem>>, vector<128x128xf32>
    %c0_13 = arith.constant 0 : index
    %c0_14 = arith.constant 0 : index
    %19 = vector.load %arg7[%c0_13, %c0_14] : memref<1x128xf32, #tpu.memory_space<vmem>>, vector<1x128xf32>
    %cst_15 = arith.constant dense<0.000000e+00> : vector<256x128xf32>
    %20 = tpu.matmul %17, %18, %cst_15 {dimension_numbers = #tpu.dot_dimension_numbers<[1], [0], [0], [1], [0, 0, 1, 1], [], []>} : vector<256x128xf32>, vector<128x128xf32>, vector<256x128xf32> -> vector<256x128xf32>
    %21 = vector.broadcast %19 : vector<1x128xf32> to vector<256x128xf32>
    %22 = arith.addf %20, %21 : vector<256x128xf32>
    %23 = arith.index_cast %1 : i32 to index
    %c0_16 = arith.constant 0 : index
    %24 = vector.load %arg8[%23, %c0_16] : memref<256x128xf32, #tpu.memory_space<vmem>>, vector<256x128xf32>
    tpu.vector_store %arg8[%23, %c0_16], %22 {strides = array<i32>} : memref<256x128xf32, #tpu.memory_space<vmem>>, vector<256x128xf32>,
    %c1_i32 = arith.constant 1 : i32
    return
  }
  func.func @transform_0(%arg0: i32) -> (i32, i32) {
    %c0_i32 = arith.constant 0 : i32
    %c0_i32_0 = arith.constant 0 : i32
    return %arg0, %c0_i32 : i32, i32
  }
  func.func @transform_1(%arg0: i32) -> (i32, i32) {
    %c0_i32 = arith.constant 0 : i32
    %c0_i32_0 = arith.constant 0 : i32
    %c0_i32_1 = arith.constant 0 : i32
    return %c0_i32, %c0_i32_0 : i32, i32
  }
  func.func @transform_2(%arg0: i32) -> (i32, i32) {
    %c0_i32 = arith.constant 0 : i32
    %c0_i32_0 = arith.constant 0 : i32
    %c0_i32_1 = arith.constant 0 : i32
    return %c0_i32, %c0_i32_0 : i32, i32
  }
  func.func @transform_3(%arg0: i32) -> (i32, i32) {
    %c0_i32 = arith.constant 0 : i32
    %c0_i32_0 = arith.constant 0 : i32
    %c0_i32_1 = arith.constant 0 : i32
    return %c0_i32, %c0_i32_0 : i32, i32
  }
  func.func @transform_4(%arg0: i32) -> (i32, i32) {
    %c0_i32 = arith.constant 0 : i32
    %c0_i32_0 = arith.constant 0 : i32
    %c0_i32_1 = arith.constant 0 : i32
    return %c0_i32, %c0_i32_0 : i32, i32
  }
  func.func @transform_5(%arg0: i32) -> (i32, i32) {
    %c0_i32 = arith.constant 0 : i32
    %c0_i32_0 = arith.constant 0 : i32
    %c0_i32_1 = arith.constant 0 : i32
    return %c0_i32, %c0_i32_0 : i32, i32
  }
  func.func @transform_6(%arg0: i32) -> (i32, i32) {
    %c0_i32 = arith.constant 0 : i32
    %c0_i32_0 = arith.constant 0 : i32
    %c0_i32_1 = arith.constant 0 : i32
    return %c0_i32, %c0_i32_0 : i32, i32
  }
  func.func @transform_7(%arg0: i32) -> (i32, i32) {
    %c0_i32 = arith.constant 0 : i32
    %c0_i32_0 = arith.constant 0 : i32
    return %arg0, %c0_i32 : i32, i32
  }
}

</mosaic_0001>

<llo_original>
// kernel: tpu_custom_call.1
$region0: #{tpu_custom_call.1}
  #allocation0 [shape = 'u32[]', space=smem, size = 0x4, offset = 0x4, fixed_abs, tag = 'smem constant byte address 0x4 - core index']
  #allocation1 [shape = 'u32[144,128]{1,0:T(1,128)}', space=vmem, size = 0x12000, scoped, tag = 'internal scratch']
  %s0 = inlined_call_operand.hbm [shape: f32[300,128], index: 0, kind: input, shape index: {}]
  %s1 = inlined_call_operand.hbm [shape: f32[128,128], index: 1, kind: input, shape index: {}]
  %s2 = inlined_call_operand.vmem [shape: f32[1,128], index: 2, kind: input, shape index: {}]
  %s3 = inlined_call_operand.hbm [shape: f32[128,128], index: 3, kind: input, shape index: {}]
  %s4 = inlined_call_operand.vmem [shape: f32[1,128], index: 4, kind: input, shape index: {}]
  %s5 = inlined_call_operand.hbm [shape: f32[128,128], index: 5, kind: input, shape index: {}]
  %s6 = inlined_call_operand.vmem [shape: f32[1,128], index: 6, kind: input, shape index: {}]
  %s7 = inlined_call_operand.hbm [shape: f32[300,128], index: 7, kind: output, shape index: {}]
  %s8 = sld [smem:[#allocation0]]
  $region77: #{tpu_custom_call.1} parent=0
    _
  %s10 = ssub.s32 1, %s8
  %s11 = scalar_select 0, %s10, %s8
  $region1: #{tpu_custom_call.1} parent=0
    #allocation2 [shape = 'u8[262144]{0}', space=vmem, size = 0x40000, scoped, tag = 'input window, operand 0']
    #allocation3 [shape = 's32[2]{0}', space=sflag, size = 0x8, scoped, tag = 'scoped memory for tpu_custom_call.1']
    #allocation4 [shape = 's32[2]{0}', space=sflag, size = 0x8, scoped, tag = 'scoped memory for tpu_custom_call.1']
    #allocation5 [shape = 'u8[65536]{0}', space=vmem, size = 0x10000, scoped, tag = 'input window, operand 1, single buffered']
    #allocation6 [shape = 's32[1]{0}', space=sflag, size = 0x4, scoped, tag = 'scoped memory for tpu_custom_call.1']
    #allocation7 [shape = 'u8[65536]{0}', space=vmem, size = 0x10000, scoped, tag = 'input window, operand 3, single buffered']
    #allocation8 [shape = 'u8[65536]{0}', space=vmem, size = 0x10000, scoped, tag = 'input window, operand 5, single buffered']
    #allocation9 [shape = 's32[1]{0}', space=sflag, size = 0x4, scoped, tag = 'scoped memory for tpu_custom_call.1']
    #allocation10 [shape = 'u8[262144]{0}', space=vmem, size = 0x40000, scoped, tag = 'output window, operand 0']
    %12 = vsyncpa [#allocation3], 0
    %s13 = scalar_lea.sflag [#allocation3], 1
    %14 = vsyncpa %s13, 0
    %15 = vsyncpa [#allocation6], 0
    %16 = vsyncpa [#allocation9], 0
    %17 = vsyncpa [#allocation4], 0
    %s18 = scalar_lea.sflag [#allocation4], 1
    %19 = vsyncpa %s18, 0
    loop: start=0, step=1, limit=4
    $region2: #{tpu_custom_call.1} parent=1 // loop_pre_header
      _
    $region3: #{tpu_custom_call.1} parent=1 // loop_header
      %s21 = sphi 0, %s25
      %p22 = scmp.ge.s32.totalorder %s21, 4
      %s31 = sphi 0, %s33
      %s34 = sphi 0, %s31
      %s35 = sphi 0, %s34
      %s51 = sphi 0, %s35
      %s55 = sphi 0, %s55
      %s57 = sphi 0, %s55
      %s58 = sphi 0, %s57
      %s72 = sphi 0, %s58
      %s76 = sphi 0, %s76
      %s78 = sphi 0, %s76
      %s79 = sphi 0, %s78
      %s93 = sphi 0, %s79
      %s97 = sphi 0, %s97
      %s99 = sphi 0, %s97
      %s100 = sphi 0, %s99
      %s114 = sphi 0, %s100
      %s118 = sphi 0, %s118
      %s120 = sphi 0, %s118
      %s121 = sphi 0, %s120
      %s135 = sphi 0, %s121
      %s139 = sphi 0, %s139
      %s141 = sphi 0, %s139
      %s142 = sphi 0, %s141
      %s156 = sphi 0, %s142
      %s160 = sphi 0, %s160
      %s162 = sphi 0, %s160
      %s163 = sphi 0, %s162
      %s177 = sphi 0, %s163
      %s183 = sphi 0, %s185
      %s186 = sphi 0, %s183
      %s187 = sphi 0, %s186
      %s203 = sphi 0, %s187
    $region4: #{tpu_custom_call.1} parent=1 // loop_header_branch
      %24 = sbr.rel (%p22) target = $region8
    $region5: #{tpu_custom_call.1} parent=1 // loop_body
      %s26 = ssub.s32 %s21, 1
      %s27 = ssub.s32 %s21, 2
      %s28 = sadd.s32 %s21, 1
      %s29 = ssub.s32 %s21, %s28
      %p30 = scmp.eq.s32.totalorder %s29, 0
      %s32 = sadd.s32 %s31, 1
      %s33 = scalar_select %p30, %s31, %s32
      %p36 = pneg %p30
      %p37 = scmp.eq.s32.totalorder %s21, 1
      %p38 = por %p36, %p37
      %p39 = scmp.ne.s32.totalorder %s31, %s34
      %p40 = scmp.eq.s32.totalorder %s21, 0
      %p41 = por %p39, %p40
      %p42 = scmp.ne.s32.totalorder %s31, %s34
      %p43 = scmp.eq.s32.totalorder %s26, 1
      %p44 = por %p42, %p43
      %p45 = scmp.ne.s32.totalorder %s34, %s35
      %p46 = scmp.eq.s32.totalorder %s26, 0
      %p47 = por %p45, %p46
      %p48 = scmp.ne.s32.totalorder %s34, %s35
      %p49 = scmp.eq.s32.totalorder %s27, 1
      %p50 = por %p48, %p49
      %p52 = scmp.ne.s32.totalorder %s35, %s51
      %p53 = scmp.eq.s32.totalorder %s27, 0
      %p54 = por %p52, %p53
      %s56 = sadd.s32 %s55, 1
      %p59 = scmp.eq.s32.totalorder %s21, 1
      %p60 = scmp.ne.s32.totalorder %s55, %s57
      %p61 = scmp.eq.s32.totalorder %s21, 0
      %p62 = por %p60, %p61
      %p63 = scmp.ne.s32.totalorder %s55, %s57
      %p64 = scmp.eq.s32.totalorder %s26, 1
      %p65 = por %p63, %p64
      %p66 = scmp.ne.s32.totalorder %s57, %s58
      %p67 = scmp.eq.s32.totalorder %s26, 0
      %p68 = por %p66, %p67
      %p69 = scmp.ne.s32.totalorder %s57, %s58
      %p70 = scmp.eq.s32.totalorder %s27, 1
      %p71 = por %p69, %p70
      %p73 = scmp.ne.s32.totalorder %s58, %s72
      %p74 = scmp.eq.s32.totalorder %s27, 0
      %p75 = por %p73, %p74
      %s77 = sadd.s32 %s76, 1
      %p80 = scmp.eq.s32.totalorder %s21, 1
      %p81 = scmp.ne.s32.totalorder %s76, %s78
      %p82 = scmp.eq.s32.totalorder %s21, 0
      %p83 = por %p81, %p82
      %p84 = scmp.ne.s32.totalorder %s76, %s78
      %p85 = scmp.eq.s32.totalorder %s26, 1
      %p86 = por %p84, %p85
      %p87 = scmp.ne.s32.totalorder %s78, %s79
      %p88 = scmp.eq.s32.totalorder %s26, 0
      %p89 = por %p87, %p88
      %p90 = scmp.ne.s32.totalorder %s78, %s79
      %p91 = scmp.eq.s32.totalorder %s27, 1
      %p92 = por %p90, %p91
      %p94 = scmp.ne.s32.totalorder %s79, %s93
      %p95 = scmp.eq.s32.totalorder %s27, 0
      %p96 = por %p94, %p95
      %s98 = sadd.s32 %s97, 1
      %p101 = scmp.eq.s32.totalorder %s21, 1
      %p102 = scmp.ne.s32.totalorder %s97, %s99
      %p103 = scmp.eq.s32.totalorder %s21, 0
      %p104 = por %p102, %p103
      %p105 = scmp.ne.s32.totalorder %s97, %s99
      %p106 = scmp.eq.s32.totalorder %s26, 1
      %p107 = por %p105, %p106
      %p108 = scmp.ne.s32.totalorder %s99, %s100
      %p109 = scmp.eq.s32.totalorder %s26, 0
      %p110 = por %p108, %p109
      %p111 = scmp.ne.s32.totalorder %s99, %s100
      %p112 = scmp.eq.s32.totalorder %s27, 1
      %p113 = por %p111, %p112
      %p115 = scmp.ne.s32.totalorder %s100, %s114
      %p116 = scmp.eq.s32.totalorder %s27, 0
      %p117 = por %p115, %p116
      %s119 = sadd.s32 %s118, 1
      %p122 = scmp.eq.s32.totalorder %s21, 1
      %p123 = scmp.ne.s32.totalorder %s118, %s120
      %p124 = scmp.eq.s32.totalorder %s21, 0
      %p125 = por %p123, %p124
      %p126 = scmp.ne.s32.totalorder %s118, %s120
      %p127 = scmp.eq.s32.totalorder %s26, 1
      %p128 = por %p126, %p127
      %p129 = scmp.ne.s32.totalorder %s120, %s121
      %p130 = scmp.eq.s32.totalorder %s26, 0
      %p131 = por %p129, %p130
      %p132 = scmp.ne.s32.totalorder %s120, %s121
      %p133 = scmp.eq.s32.totalorder %s27, 1
      %p134 = por %p132, %p133
      %p136 = scmp.ne.s32.totalorder %s121, %s135
      %p137 = scmp.eq.s32.totalorder %s27, 0
      %p138 = por %p136, %p137
      %s140 = sadd.s32 %s139, 1
      %p143 = scmp.eq.s32.totalorder %s21, 1
      %p144 = scmp.ne.s32.totalorder %s139, %s141
      %p145 = scmp.eq.s32.totalorder %s21, 0
      %p146 = por %p144, %p145
      %p147 = scmp.ne.s32.totalorder %s139, %s141
      %p148 = scmp.eq.s32.totalorder %s26, 1
      %p149 = por %p147, %p148
      %p150 = scmp.ne.s32.totalorder %s141, %s142
      %p151 = scmp.eq.s32.totalorder %s26, 0
      %p152 = por %p150, %p151
      %p153 = scmp.ne.s32.totalorder %s141, %s142
      %p154 = scmp.eq.s32.totalorder %s27, 1
      %p155 = por %p153, %p154
      %p157 = scmp.ne.s32.totalorder %s142, %s156
      %p158 = scmp.eq.s32.totalorder %s27, 0
      %p159 = por %p157, %p158
      %s161 = sadd.s32 %s160, 1
      %p164 = scmp.eq.s32.totalorder %s21, 1
      %p165 = scmp.ne.s32.totalorder %s160, %s162
      %p166 = scmp.eq.s32.totalorder %s21, 0
      %p167 = por %p165, %p166
      %p168 = scmp.ne.s32.totalorder %s160, %s162
      %p169 = scmp.eq.s32.totalorder %s26, 1
      %p170 = por %p168, %p169
      %p171 = scmp.ne.s32.totalorder %s162, %s163
      %p172 = scmp.eq.s32.totalorder %s26, 0
      %p173 = por %p171, %p172
      %p174 = scmp.ne.s32.totalorder %s162, %s163
      %p175 = scmp.eq.s32.totalorder %s27, 1
      %p176 = por %p174, %p175
      %p178 = scmp.ne.s32.totalorder %s163, %s177
      %p179 = scmp.eq.s32.totalorder %s27, 0
      %p180 = por %p178, %p179
      %s181 = ssub.s32 %s21, %s28
      %p182 = scmp.eq.s32.totalorder %s181, 0
      %s184 = sadd.s32 %s183, 1
      %s185 = scalar_select %p182, %s183, %s184
      %p188 = pneg %p182
      %p189 = scmp.eq.s32.totalorder %s21, 1
      %p190 = por %p188, %p189
      %p191 = scmp.ne.s32.totalorder %s183, %s186
      %p192 = scmp.eq.s32.totalorder %s21, 0
      %p193 = por %p191, %p192
      %p194 = scmp.ne.s32.totalorder %s183, %s186
      %p195 = scmp.eq.s32.totalorder %s26, 1
      %p196 = por %p194, %p195
      %p197 = scmp.ne.s32.totalorder %s186, %s187
      %p198 = scmp.eq.s32.totalorder %s26, 0
      %p199 = por %p197, %p198
      %p200 = scmp.ne.s32.totalorder %s186, %s187
      %p201 = scmp.eq.s32.totalorder %s27, 1
      %p202 = por %p200, %p201
      %p204 = scmp.ne.s32.totalorder %s187, %s203
      %p205 = scmp.eq.s32.totalorder %s27, 0
      %p206 = por %p204, %p205
      %p207 = scmp.le.s32.totalorder 1, %s21
      %p208 = scmp.lt.s32.totalorder %s21, 3
      %p209 = pnand %p207, %p208
      %p210 = pneg %p209
      // Predicated region
      $region9: #{tpu_custom_call.1} parent=5 // pred_check
        _
      $region10: #{tpu_custom_call.1} parent=5 // pred_check_branch
        %212 = sbr.rel (%p209) target = $region12
      $region11: #{tpu_custom_call.1} parent=5 // pred_region
        %s213 = ssub.s32 %s21, 1
        // Predicated region
        $region13: #{tpu_custom_call.1} parent=11 // pred_check
          %p214 = pneg %p68
        $region14: #{tpu_custom_call.1} parent=11 // pred_check_branch
          %216 = sbr.rel (%p214) target = $region16
        $region15: #{tpu_custom_call.1} parent=11 // pred_region
          %s218 = ssub.s32 2048, 2048
          %219 = vsyncadd [#allocation6], %s218
          %s220 = sshll.u32 [#allocation5], 4
          %s221 = int_to_ptr.vmem [resolvable:$true] %s220
          %226 = dma.hbm_to_vmem [thread:$0]  %s1, 2048, %s221, [#allocation6], 128, 128, 8
        $region16: #{tpu_custom_call.1} parent=11 // pred_fallthru
          _
        // Predicated region
        $region17: #{tpu_custom_call.1} parent=11 // pred_check
          %p227 = pneg %p89
        $region18: #{tpu_custom_call.1} parent=11 // pred_check_branch
          %229 = sbr.rel (%p227) target = $region20
        $region19: #{tpu_custom_call.1} parent=11 // pred_region
          _
        $region20: #{tpu_custom_call.1} parent=11 // pred_fallthru
          _
        // Predicated region
        $region21: #{tpu_custom_call.1} parent=11 // pred_check
          %p230 = pneg %p110
        $region22: #{tpu_custom_call.1} parent=11 // pred_check_branch
          %232 = sbr.rel (%p230) target = $region24
        $region23: #{tpu_custom_call.1} parent=11 // pred_region
          %s234 = ssub.s32 2048, 2048
          %235 = vsyncadd [#allocation6], %s234
          %s236 = sshll.u32 [#allocation7], 4
          %s237 = int_to_ptr.vmem [resolvable:$true] %s236
          %242 = dma.hbm_to_vmem [thread:$0]  %s3, 2048, %s237, [#allocation6], 128, 128, 8
        $region24: #{tpu_custom_call.1} parent=11 // pred_fallthru
          _
        // Predicated region
        $region25: #{tpu_custom_call.1} parent=11 // pred_check
          %p243 = pneg %p131
        $region26: #{tpu_custom_call.1} parent=11 // pred_check_branch
          %245 = sbr.rel (%p243) target = $region28
        $region27: #{tpu_custom_call.1} parent=11 // pred_region
          _
        $region28: #{tpu_custom_call.1} parent=11 // pred_fallthru
          _
        // Predicated region
        $region29: #{tpu_custom_call.1} parent=11 // pred_check
          %p246 = pneg %p152
        $region30: #{tpu_custom_call.1} parent=11 // pred_check_branch
          %248 = sbr.rel (%p246) target = $region32
        $region31: #{tpu_custom_call.1} parent=11 // pred_region
          %s250 = ssub.s32 2048, 2048
          %251 = vsyncadd [#allocation9], %s250
          %s252 = sshll.u32 [#allocation8], 4
          %s253 = int_to_ptr.vmem [resolvable:$true] %s252
          %258 = dma.hbm_to_vmem [thread:$0]  %s5, 2048, %s253, [#allocation9], 128, 128, 8
        $region32: #{tpu_custom_call.1} parent=11 // pred_fallthru
          _
        // Predicated region
        $region33: #{tpu_custom_call.1} parent=11 // pred_check
          %p259 = pneg %p173
        $region34: #{tpu_custom_call.1} parent=11 // pred_check_branch
          %261 = sbr.rel (%p259) target = $region36
        $region35: #{tpu_custom_call.1} parent=11 // pred_region
          _
        $region36: #{tpu_custom_call.1} parent=11 // pred_fallthru
          _
      $region12: #{tpu_custom_call.1} parent=5 // pred_fallthru
        _
      %p262 = scmp.lt.s32.totalorder %s21, 2
      // Predicated region
      $region37: #{tpu_custom_call.1} parent=5 // pred_check
        %p263 = pneg %p262
      $region38: #{tpu_custom_call.1} parent=5 // pred_check_branch
        %265 = sbr.rel (%p263) target = $region40
      $region39: #{tpu_custom_call.1} parent=5 // pred_region
        // Predicated region
        $region41: #{tpu_custom_call.1} parent=39 // pred_check
          %p266 = pneg %p41
        $region42: #{tpu_custom_call.1} parent=39 // pred_check_branch
          %268 = sbr.rel (%p266) target = $region44
        $region43: #{tpu_custom_call.1} parent=39 // pred_region
          %s269 = sand.u32 %s31, 1
          %s270 = scalar_lea.sflag [#allocation3], %s269
          %s271 = sand.u32 %s31, 1
          %s272 = smul.addr %s271, 256
          %s273 = scalar_lea.vmem [#allocation2], %s272
          %s274 = smul.u32 32, %s21
          %s275 = ssub.s32 38, %s274
          %p276 = scmp.lt.s32.totalorder %s275, 32
          %s277 = scalar_select %p276, %s275, 32
          %s278 = smul.u32 128, %s277
          %s280 = ssub.s32 4096, %s278
          %281 = vsyncadd %s270, %s280
          %p282 = scmp.ne.s32.totalorder 0, %s278
          %s283 = smul.addr %s274, 128
          %s284 = scalar_lea.hbm %s0, %s283
          %s285 = smul.u32 8, %s277
          %s286 = sshll.u32 %s273, 4
          %s287 = int_to_ptr.vmem [resolvable:$true] %s286
          %s288 = sshll.u32 %s285, 4
          %292 = dma.hbm_to_vmem [thread:$0]  (%p282), %s284, %s288, %s287, %s270, 128, 128, 8
        $region44: #{tpu_custom_call.1} parent=39 // pred_fallthru
          _
      $region40: #{tpu_custom_call.1} parent=5 // pred_fallthru
        _
      %p293 = scmp.le.s32.totalorder 1, %s21
      %p294 = scmp.lt.s32.totalorder %s21, 3
      %p295 = pnand %p293, %p294
      %p296 = pneg %p295
      // Predicated region
      $region45: #{tpu_custom_call.1} parent=5 // pred_check
        _
      $region46: #{tpu_custom_call.1} parent=5 // pred_check_branch
        %298 = sbr.rel (%p295) target = $region48
      $region47: #{tpu_custom_call.1} parent=5 // pred_region
        %s299 = ssub.s32 %s21, 1
        %s300 = sand.u32 %s34, 1
        %s301 = scalar_lea.sflag [#allocation3], %s300
        %s302 = sand.u32 %s34, 1
        %s303 = smul.addr %s302, 256
        %s304 = scalar_lea.vmem [#allocation2], %s303
        // Predicated region
        $region49: #{tpu_custom_call.1} parent=47 // pred_check
          %p305 = pneg %p47
        $region50: #{tpu_custom_call.1} parent=47 // pred_check_branch
          %307 = sbr.rel (%p305) target = $region52
        $region51: #{tpu_custom_call.1} parent=47 // pred_region
          %308 = dma.done %s301, 4096
        $region52: #{tpu_custom_call.1} parent=47 // pred_fallthru
          _
        // Predicated region
        $region53: #{tpu_custom_call.1} parent=47 // pred_check
          %p309 = pneg %p68
        $region54: #{tpu_custom_call.1} parent=47 // pred_check_branch
          %311 = sbr.rel (%p309) target = $region56
        $region55: #{tpu_custom_call.1} parent=47 // pred_region
          %312 = dma.done [#allocation6], 2048
        $region56: #{tpu_custom_call.1} parent=47 // pred_fallthru
          _
        // Predicated region
        $region57: #{tpu_custom_call.1} parent=47 // pred_check
          %p313 = pneg %p110
        $region58: #{tpu_custom_call.1} parent=47 // pred_check_branch
          %315 = sbr.rel (%p313) target = $region60
        $region59: #{tpu_custom_call.1} parent=47 // pred_region
          %316 = dma.done [#allocation6], 2048
        $region60: #{tpu_custom_call.1} parent=47 // pred_fallthru
          _
        // Predicated region
        $region61: #{tpu_custom_call.1} parent=47 // pred_check
          %p317 = pneg %p152
        $region62: #{tpu_custom_call.1} parent=47 // pred_check_branch
          %319 = sbr.rel (%p317) target = $region64
        $region63: #{tpu_custom_call.1} parent=47 // pred_region
          %320 = dma.done [#allocation9], 2048
        $region64: #{tpu_custom_call.1} parent=47 // pred_fallthru
          _
        %s321 = sand.u32 %s34, 1
        %s322 = scalar_lea.sflag [#allocation3], %s321
        %s323 = sand.u32 %s34, 1
        %s324 = smul.addr %s323, 256
        %s325 = scalar_lea.vmem [#allocation2], %s324
        %p326 = pneg %p47
        %p327 = pneg %p44
        %p328 = pneg %p68
        %p329 = pneg %p65
        %p330 = pneg %p89
        %p331 = pneg %p86
        %p332 = pneg %p110
        %p333 = pneg %p107
        %p334 = pneg %p131
        %p335 = pneg %p128
        %p336 = pneg %p152
        %p337 = pneg %p149
        %p338 = pneg %p173
        %p339 = pneg %p170
        %p340 = pneg %p199
        %p341 = pneg %p196
        %s342 = sand.u32 %s186, 1
        %s343 = scalar_lea.sflag [#allocation4], %s342
        %s344 = sand.u32 %s186, 1
        %s345 = smul.addr %s344, 256
        %s346 = scalar_lea.vmem [#allocation10], %s345
        %s347 = smul.u32 32, %s26
        %s348 = ssub.s32 38, %s347
        %p349 = scmp.lt.s32.totalorder %s348, 32
        %s350 = scalar_select %p349, %s348, 32
        %s351 = smul.u32 128, %s350
        %s352 = smul.u32 32, %s26
        %s353 = ssub.s32 38, %s352
        %p354 = scmp.lt.s32.totalorder %s353, 32
        %s355 = scalar_select %p354, %s353, 32
        %s356 = smul.u32 128, %s355
        %v357 = vld [vmem:[%s304] sm:$0xff]
        %v358 = vld [vmem:[%s304 + $0x8] sm:$0xff]
        %v359 = vld [vmem:[%s304 + $0x10] sm:$0xff]
        %v360 = vld [vmem:[%s304 + $0x18] sm:$0xff]
        %v361 = vld [vmem:[%s304 + $0x20] sm:$0xff]
        %v362 = vld [vmem:[%s304 + $0x28] sm:$0xff]
        %v363 = vld [vmem:[%s304 + $0x30] sm:$0xff]
        %v364 = vld [vmem:[%s304 + $0x38] sm:$0xff]
        %v365 = vld [vmem:[%s304 + $0x40] sm:$0xff]
        %v366 = vld [vmem:[%s304 + $0x48] sm:$0xff]
        %v367 = vld [vmem:[%s304 + $0x50] sm:$0xff]
        %v368 = vld [vmem:[%s304 + $0x58] sm:$0xff]
        %v369 = vld [vmem:[%s304 + $0x60] sm:$0xff]
        %v370 = vld [vmem:[%s304 + $0x68] sm:$0xff]
        %v371 = vld [vmem:[%s304 + $0x70] sm:$0xff]
        %v372 = vld [vmem:[%s304 + $0x78] sm:$0xff]
        %v373 = vld [vmem:[%s304 + $0x80] sm:$0xff]
        %v374 = vld [vmem:[%s304 + $0x88] sm:$0xff]
        %v375 = vld [vmem:[%s304 + $0x90] sm:$0xff]
        %v376 = vld [vmem:[%s304 + $0x98] sm:$0xff]
        %v377 = vld [vmem:[%s304 + $0xa0] sm:$0xff]
        %v378 = vld [vmem:[%s304 + $0xa8] sm:$0xff]
        %v379 = vld [vmem:[%s304 + $0xb0] sm:$0xff]
        %v380 = vld [vmem:[%s304 + $0xb8] sm:$0xff]
        %v381 = vld [vmem:[%s304 + $0xc0] sm:$0xff]
        %v382 = vld [vmem:[%s304 + $0xc8] sm:$0xff]
        %v383 = vld [vmem:[%s304 + $0xd0] sm:$0xff]
        %v384 = vld [vmem:[%s304 + $0xd8] sm:$0xff]
        %v385 = vld [vmem:[%s304 + $0xe0] sm:$0xff]
        %v386 = vld [vmem:[%s304 + $0xe8] sm:$0xff]
        %v387 = vld [vmem:[%s304 + $0xf0] sm:$0xff]
        %v388 = vld [vmem:[%s304 + $0xf8] sm:$0xff]
        %v389 = vld [vmem:[#allocation5] sm:$0xff]
        %v390 = vld [vmem:[#allocation5 + $0x8] sm:$0xff]
        %v391 = vld [vmem:[#allocation5 + $0x10] sm:$0xff]
        %v392 = vld [vmem:[#allocation5 + $0x18] sm:$0xff]
        %v393 = vld [vmem:[#allocation5 + $0x20] sm:$0xff]
        %v394 = vld [vmem:[#allocation5 + $0x28] sm:$0xff]
        %v395 = vld [vmem:[#allocation5 + $0x30] sm:$0xff]
        %v396 = vld [vmem:[#allocation5 + $0x38] sm:$0xff]
        %v397 = vld [vmem:[#allocation5 + $0x40] sm:$0xff]
        %v398 = vld [vmem:[#allocation5 + $0x48] sm:$0xff]
        %v399 = vld [vmem:[#allocation5 + $0x50] sm:$0xff]
        %v400 = vld [vmem:[#allocation5 + $0x58] sm:$0xff]
        %v401 = vld [vmem:[#allocation5 + $0x60] sm:$0xff]
        %v402 = vld [vmem:[#allocation5 + $0x68] sm:$0xff]
        %v403 = vld [vmem:[#allocation5 + $0x70] sm:$0xff]
        %v404 = vld [vmem:[#allocation5 + $0x78] sm:$0xff]
        %v405 = vld [vmem:[%s2] sm:$0x1]
        %v407 = vlaneseq
        %v408 = vshrl.u32 %v407, 7
        %v409 = vsub.s32 0, %v408
        %v410 = vrot.slane %v405, %v409
        %412 = vmatprep.subr.mxu0 0.0
        %413 = vmatpush1.msra.mxu0 %v404
        %414 = vmatprep.subr.mxu0 0.0
        %415 = vmatpush1.msra.mxu0 %v403
        %416 = vmatprep.subr.mxu0 0.0
        %417 = vmatpush1.msra.mxu0 %v402
        %418 = vmatprep.subr.mxu0 0.0
        %419 = vmatpush1.msra.mxu0 %v401
        %420 = vmatprep.subr.mxu0 0.0
        %421 = vmatpush1.msra.mxu0 %v400
        %422 = vmatprep.subr.mxu0 0.0
        %423 = vmatpush1.msra.mxu0 %v399
        %424 = vmatprep.subr.mxu0 0.0
        %425 = vmatpush1.msra.mxu0 %v398
        %426 = vmatprep.subr.mxu0 0.0
        %427 = vmatpush1.msra.mxu0 %v397
        %428 = vmatprep.subr.mxu0 0.0
        %429 = vmatpush1.msra.mxu0 %v396
        %430 = vmatprep.subr.mxu0 0.0
        %431 = vmatpush1.msra.mxu0 %v395
        %432 = vmatprep.subr.mxu0 0.0
        %433 = vmatpush1.msra.mxu0 %v394
        %434 = vmatprep.subr.mxu0 0.0
        %435 = vmatpush1.msra.mxu0 %v393
        %436 = vmatprep.subr.mxu0 0.0
        %437 = vmatpush1.msra.mxu0 %v392
        %438 = vmatprep.subr.mxu0 0.0
        %439 = vmatpush1.msra.mxu0 %v391
        %440 = vmatprep.subr.mxu0 0.0
        %441 = vmatpush1.msra.mxu0 %v390
        %442 = vmatprep.subr.mxu0 0.0
        %443 = vmatpush1.msra.mxu0 %v389
        %444 = vmatprep.subr.mxu0 0.0
        %445 = vmatpush2.msra.mxu0 0.0
        %446 = vmatprep.subr.mxu0 0.0
        %447 = vmatpush2.msra.mxu0 0.0
        %448 = vmatprep.subr.mxu0 0.0
        %449 = vmatpush2.msra.mxu0 0.0
        %450 = vmatprep.subr.mxu0 0.0
        %451 = vmatpush2.msra.mxu0 0.0
        %452 = vmatprep.subr.mxu0 0.0
        %453 = vmatpush2.msra.mxu0 0.0
        %454 = vmatprep.subr.mxu0 0.0
        %455 = vmatpush2.msra.mxu0 0.0
        %456 = vmatprep.subr.mxu0 0.0
        %457 = vmatpush2.msra.mxu0 0.0
        %458 = vmatprep.subr.mxu0 0.0
        %459 = vmatpush2.msra.mxu0 0.0
        %460 = vmatprep.subr.mxu0 0.0
        %461 = vmatpush2.msra.mxu0 0.0
        %462 = vmatprep.subr.mxu0 0.0
        %463 = vmatpush2.msra.mxu0 0.0
        %464 = vmatprep.subr.mxu0 0.0
        %465 = vmatpush2.msra.mxu0 0.0
        %466 = vmatprep.subr.mxu0 0.0
        %467 = vmatpush2.msra.mxu0 0.0
        %468 = vmatprep.subr.mxu0 0.0
        %469 = vmatpush2.msra.mxu0 0.0
        %470 = vmatprep.subr.mxu0 0.0
        %471 = vmatpush2.msra.mxu0 0.0
        %472 = vmatprep.subr.mxu0 0.0
        %473 = vmatpush2.msra.mxu0 0.0
        %474 = vmatprep.subr.mxu0 0.0
        %475 = vmatpush2.msra.mxu0 0.0
        %476 = vmatprep.mubr.f32.mxu0 0.0
        %477 = vmatmul.mubr.f32.gmra.mxu0 %v357
        %v478 = vpop.f32.mrf.mxu0
        %v479 = vadd.f32 %v410, %v478
        %v480 = vpop.f32.mrf.mxu0
        %481 = vmatprep.mubr.f32.mxu0 0.0
        %482 = vmatmul.mubr.f32.gmra.mxu0 %v358
        %v483 = vpop.f32.mrf.mxu0
        %v484 = vadd.f32 %v410, %v483
        %v485 = vpop.f32.mrf.mxu0
        %486 = vmatprep.mubr.f32.mxu0 0.0
        %487 = vmatmul.mubr.f32.gmra.mxu0 %v359
        %v488 = vpop.f32.mrf.mxu0
        %v489 = vadd.f32 %v410, %v488
        %v490 = vpop.f32.mrf.mxu0
        %491 = vmatprep.mubr.f32.mxu0 0.0
        %492 = vmatmul.mubr.f32.gmra.mxu0 %v360
        %v493 = vpop.f32.mrf.mxu0
        %v494 = vadd.f32 %v410, %v493
        %v495 = vpop.f32.mrf.mxu0
        %496 = vmatprep.mubr.f32.mxu0 0.0
        %497 = vmatmul.mubr.f32.gmra.mxu0 %v361
        %v498 = vpop.f32.mrf.mxu0
        %v499 = vadd.f32 %v410, %v498
        %v500 = vpop.f32.mrf.mxu0
        %501 = vmatprep.mubr.f32.mxu0 0.0
        %502 = vmatmul.mubr.f32.gmra.mxu0 %v362
        %v503 = vpop.f32.mrf.mxu0
        %v504 = vadd.f32 %v410, %v503
        %v505 = vpop.f32.mrf.mxu0
        %506 = vmatprep.mubr.f32.mxu0 0.0
        %507 = vmatmul.mubr.f32.gmra.mxu0 %v363
        %v508 = vpop.f32.mrf.mxu0
        %v509 = vadd.f32 %v410, %v508
        %v510 = vpop.f32.mrf.mxu0
        %511 = vmatprep.mubr.f32.mxu0 0.0
        %512 = vmatmul.mubr.f32.gmra.mxu0 %v364
        %v513 = vpop.f32.mrf.mxu0
        %v514 = vadd.f32 %v410, %v513
        %v515 = vpop.f32.mrf.mxu0
        %516 = vmatprep.mubr.f32.mxu0 0.0
        %517 = vmatmul.mubr.f32.gmra.mxu0 %v365
        %v518 = vpop.f32.mrf.mxu0
        %v519 = vadd.f32 %v410, %v518
        %v520 = vpop.f32.mrf.mxu0
        %521 = vmatprep.mubr.f32.mxu0 0.0
        %522 = vmatmul.mubr.f32.gmra.mxu0 %v366
        %v523 = vpop.f32.mrf.mxu0
        %v524 = vadd.f32 %v410, %v523
        %v525 = vpop.f32.mrf.mxu0
        %526 = vmatprep.mubr.f32.mxu0 0.0
        %527 = vmatmul.mubr.f32.gmra.mxu0 %v367
        %v528 = vpop.f32.mrf.mxu0
        %v529 = vadd.f32 %v410, %v528
        %v530 = vpop.f32.mrf.mxu0
        %531 = vmatprep.mubr.f32.mxu0 0.0
        %532 = vmatmul.mubr.f32.gmra.mxu0 %v368
        %v533 = vpop.f32.mrf.mxu0
        %v534 = vadd.f32 %v410, %v533
        %v535 = vpop.f32.mrf.mxu0
        %536 = vmatprep.mubr.f32.mxu0 0.0
        %537 = vmatmul.mubr.f32.gmra.mxu0 %v369
        %v538 = vpop.f32.mrf.mxu0
        %v539 = vadd.f32 %v410, %v538
        %v540 = vpop.f32.mrf.mxu0
        %541 = vmatprep.mubr.f32.mxu0 0.0
        %542 = vmatmul.mubr.f32.gmra.mxu0 %v370
        %v543 = vpop.f32.mrf.mxu0
        %v544 = vadd.f32 %v410, %v543
        %v545 = vpop.f32.mrf.mxu0
        %546 = vmatprep.mubr.f32.mxu0 0.0
        %547 = vmatmul.mubr.f32.gmra.mxu0 %v371
        %v548 = vpop.f32.mrf.mxu0
        %v549 = vadd.f32 %v410, %v548
        %v550 = vpop.f32.mrf.mxu0
        %551 = vmatprep.mubr.f32.mxu0 0.0
        %552 = vmatmul.mubr.f32.gmra.mxu0 %v372
        %v553 = vpop.f32.mrf.mxu0
        %v554 = vadd.f32 %v410, %v553
        %v555 = vpop.f32.mrf.mxu0
        %556 = vmatprep.mubr.f32.mxu0 0.0
        %557 = vmatmul.mubr.f32.gmra.mxu0 %v373
        %v558 = vpop.f32.mrf.mxu0
        %v559 = vadd.f32 %v410, %v558
        %v560 = vpop.f32.mrf.mxu0
        %561 = vmatprep.mubr.f32.mxu0 0.0
        %562 = vmatmul.mubr.f32.gmra.mxu0 %v374
        %v563 = vpop.f32.mrf.mxu0
        %v564 = vadd.f32 %v410, %v563
        %v565 = vpop.f32.mrf.mxu0
        %566 = vmatprep.mubr.f32.mxu0 0.0
        %567 = vmatmul.mubr.f32.gmra.mxu0 %v375
        %v568 = vpop.f32.mrf.mxu0
        %v569 = vadd.f32 %v410, %v568
        %v570 = vpop.f32.mrf.mxu0
        %571 = vmatprep.mubr.f32.mxu0 0.0
        %572 = vmatmul.mubr.f32.gmra.mxu0 %v376
        %v573 = vpop.f32.mrf.mxu0
        %v574 = vadd.f32 %v410, %v573
        %v575 = vpop.f32.mrf.mxu0
        %576 = vmatprep.mubr.f32.mxu0 0.0
        %577 = vmatmul.mubr.f32.gmra.mxu0 %v377
        %v578 = vpop.f32.mrf.mxu0
        %v579 = vadd.f32 %v410, %v578
        %v580 = vpop.f32.mrf.mxu0
        %581 = vmatprep.mubr.f32.mxu0 0.0
        %582 = vmatmul.mubr.f32.gmra.mxu0 %v378
        %v583 = vpop.f32.mrf.mxu0
        %v584 = vadd.f32 %v410, %v583
        %v585 = vpop.f32.mrf.mxu0
        %586 = vmatprep.mubr.f32.mxu0 0.0
        %587 = vmatmul.mubr.f32.gmra.mxu0 %v379
        %v588 = vpop.f32.mrf.mxu0
        %v589 = vadd.f32 %v410, %v588
        %v590 = vpop.f32.mrf.mxu0
        %591 = vmatprep.mubr.f32.mxu0 0.0
        %592 = vmatmul.mubr.f32.gmra.mxu0 %v380
        %v593 = vpop.f32.mrf.mxu0
        %v594 = vadd.f32 %v410, %v593
        %v595 = vpop.f32.mrf.mxu0
        %596 = vmatprep.mubr.f32.mxu0 0.0
        %597 = vmatmul.mubr.f32.gmra.mxu0 %v381
        %v598 = vpop.f32.mrf.mxu0
        %v599 = vadd.f32 %v410, %v598
        %v600 = vpop.f32.mrf.mxu0
        %601 = vmatprep.mubr.f32.mxu0 0.0
        %602 = vmatmul.mubr.f32.gmra.mxu0 %v382
        %v603 = vpop.f32.mrf.mxu0
        %v604 = vadd.f32 %v410, %v603
        %v605 = vpop.f32.mrf.mxu0
        %606 = vmatprep.mubr.f32.mxu0 0.0
        %607 = vmatmul.mubr.f32.gmra.mxu0 %v383
        %v608 = vpop.f32.mrf.mxu0
        %v609 = vadd.f32 %v410, %v608
        %v610 = vpop.f32.mrf.mxu0
        %611 = vmatprep.mubr.f32.mxu0 0.0
        %612 = vmatmul.mubr.f32.gmra.mxu0 %v384
        %v613 = vpop.f32.mrf.mxu0
        %v614 = vadd.f32 %v410, %v613
        %v615 = vpop.f32.mrf.mxu0
        %616 = vmatprep.mubr.f32.mxu0 0.0
        %617 = vmatmul.mubr.f32.gmra.mxu0 %v385
        %v618 = vpop.f32.mrf.mxu0
        %v619 = vadd.f32 %v410, %v618
        %v620 = vpop.f32.mrf.mxu0
        %621 = vmatprep.mubr.f32.mxu0 0.0
        %622 = vmatmul.mubr.f32.gmra.mxu0 %v386
        %v623 = vpop.f32.mrf.mxu0
        %v624 = vadd.f32 %v410, %v623
        %v625 = vpop.f32.mrf.mxu0
        %626 = vmatprep.mubr.f32.mxu0 0.0
        %627 = vmatmul.mubr.f32.gmra.mxu0 %v387
        %v628 = vpop.f32.mrf.mxu0
        %v629 = vadd.f32 %v410, %v628
        %v630 = vpop.f32.mrf.mxu0
        %631 = vmatprep.mubr.f32.mxu0 0.0
        %632 = vmatmul.mubr.f32.gmra.mxu0 %v388
        %v633 = vpop.f32.mrf.mxu0
        %v634 = vadd.f32 %v410, %v633
        %v635 = vpop.f32.mrf.mxu0
        %636 = vdwg.mxu0
        %v637 = vmax.f32 %v479, 0.0
        %v638 = vmax.f32 %v484, 0.0
        %v639 = vmax.f32 %v489, 0.0
        %v640 = vmax.f32 %v494, 0.0
        %v641 = vmax.f32 %v499, 0.0
        %v642 = vmax.f32 %v504, 0.0
        %v643 = vmax.f32 %v509, 0.0
        %v644 = vmax.f32 %v514, 0.0
        %v645 = vmax.f32 %v519, 0.0
        %v646 = vmax.f32 %v524, 0.0
        %v647 = vmax.f32 %v529, 0.0
        %v648 = vmax.f32 %v534, 0.0
        %v649 = vmax.f32 %v539, 0.0
        %v650 = vmax.f32 %v544, 0.0
        %v651 = vmax.f32 %v549, 0.0
        %v652 = vmax.f32 %v554, 0.0
        %v653 = vmax.f32 %v559, 0.0
        %v654 = vmax.f32 %v564, 0.0
        %v655 = vmax.f32 %v569, 0.0
        %v656 = vmax.f32 %v574, 0.0
        %v657 = vmax.f32 %v579, 0.0
        %v658 = vmax.f32 %v584, 0.0
        %v659 = vmax.f32 %v589, 0.0
        %v660 = vmax.f32 %v594, 0.0
        %v661 = vmax.f32 %v599, 0.0
        %v662 = vmax.f32 %v604, 0.0
        %v663 = vmax.f32 %v609, 0.0
        %v664 = vmax.f32 %v614, 0.0
        %v665 = vmax.f32 %v619, 0.0
        %v666 = vmax.f32 %v624, 0.0
        %v667 = vmax.f32 %v629, 0.0
        %v668 = vmax.f32 %v634, 0.0
        %v669 = vld [vmem:[#allocation7] sm:$0xff]
        %v670 = vld [vmem:[#allocation7 + $0x8] sm:$0xff]
        %v671 = vld [vmem:[#allocation7 + $0x10] sm:$0xff]
        %v672 = vld [vmem:[#allocation7 + $0x18] sm:$0xff]
        %v673 = vld [vmem:[#allocation7 + $0x20] sm:$0xff]
        %v674 = vld [vmem:[#allocation7 + $0x28] sm:$0xff]
        %v675 = vld [vmem:[#allocation7 + $0x30] sm:$0xff]
        %v676 = vld [vmem:[#allocation7 + $0x38] sm:$0xff]
        %v677 = vld [vmem:[#allocation7 + $0x40] sm:$0xff]
        %v678 = vld [vmem:[#allocation7 + $0x48] sm:$0xff]
        %v679 = vld [vmem:[#allocation7 + $0x50] sm:$0xff]
        %v680 = vld [vmem:[#allocation7 + $0x58] sm:$0xff]
        %v681 = vld [vmem:[#allocation7 + $0x60] sm:$0xff]
        %v682 = vld [vmem:[#allocation7 + $0x68] sm:$0xff]
        %v683 = vld [vmem:[#allocation7 + $0x70] sm:$0xff]
        %v684 = vld [vmem:[#allocation7 + $0x78] sm:$0xff]
        %v685 = vld [vmem:[%s4] sm:$0x1]
        %v687 = vlaneseq
        %v688 = vshrl.u32 %v687, 7
        %v689 = vsub.s32 0, %v688
        %v690 = vrot.slane %v685, %v689
        %692 = vmatprep.subr.mxu0 0.0
        %693 = vmatpush1.msra.mxu0 %v684
        %694 = vmatprep.subr.mxu0 0.0
        %695 = vmatpush1.msra.mxu0 %v683
        %696 = vmatprep.subr.mxu0 0.0
        %697 = vmatpush1.msra.mxu0 %v682
        %698 = vmatprep.subr.mxu0 0.0
        %699 = vmatpush1.msra.mxu0 %v681
        %700 = vmatprep.subr.mxu0 0.0
        %701 = vmatpush1.msra.mxu0 %v680
        %702 = vmatprep.subr.mxu0 0.0
        %703 = vmatpush1.msra.mxu0 %v679
        %704 = vmatprep.subr.mxu0 0.0
        %705 = vmatpush1.msra.mxu0 %v678
        %706 = vmatprep.subr.mxu0 0.0
        %707 = vmatpush1.msra.mxu0 %v677
        %708 = vmatprep.subr.mxu0 0.0
        %709 = vmatpush1.msra.mxu0 %v676
        %710 = vmatprep.subr.mxu0 0.0
        %711 = vmatpush1.msra.mxu0 %v675
        %712 = vmatprep.subr.mxu0 0.0
        %713 = vmatpush1.msra.mxu0 %v674
        %714 = vmatprep.subr.mxu0 0.0
        %715 = vmatpush1.msra.mxu0 %v673
        %716 = vmatprep.subr.mxu0 0.0
        %717 = vmatpush1.msra.mxu0 %v672
        %718 = vmatprep.subr.mxu0 0.0
        %719 = vmatpush1.msra.mxu0 %v671
        %720 = vmatprep.subr.mxu0 0.0
        %721 = vmatpush1.msra.mxu0 %v670
        %722 = vmatprep.subr.mxu0 0.0
        %723 = vmatpush1.msra.mxu0 %v669
        %724 = vmatprep.subr.mxu0 0.0
        %725 = vmatpush2.msra.mxu0 0.0
        %726 = vmatprep.subr.mxu0 0.0
        %727 = vmatpush2.msra.mxu0 0.0
        %728 = vmatprep.subr.mxu0 0.0
        %729 = vmatpush2.msra.mxu0 0.0
        %730 = vmatprep.subr.mxu0 0.0
        %731 = vmatpush2.msra.mxu0 0.0
        %732 = vmatprep.subr.mxu0 0.0
        %733 = vmatpush2.msra.mxu0 0.0
        %734 = vmatprep.subr.mxu0 0.0
        %735 = vmatpush2.msra.mxu0 0.0
        %736 = vmatprep.subr.mxu0 0.0
        %737 = vmatpush2.msra.mxu0 0.0
        %738 = vmatprep.subr.mxu0 0.0
        %739 = vmatpush2.msra.mxu0 0.0
        %740 = vmatprep.subr.mxu0 0.0
        %741 = vmatpush2.msra.mxu0 0.0
        %742 = vmatprep.subr.mxu0 0.0
        %743 = vmatpush2.msra.mxu0 0.0
        %744 = vmatprep.subr.mxu0 0.0
        %745 = vmatpush2.msra.mxu0 0.0
        %746 = vmatprep.subr.mxu0 0.0
        %747 = vmatpush2.msra.mxu0 0.0
        %748 = vmatprep.subr.mxu0 0.0
        %749 = vmatpush2.msra.mxu0 0.0
        %750 = vmatprep.subr.mxu0 0.0
        %751 = vmatpush2.msra.mxu0 0.0
        %752 = vmatprep.subr.mxu0 0.0
        %753 = vmatpush2.msra.mxu0 0.0
        %754 = vmatprep.subr.mxu0 0.0
        %755 = vmatpush2.msra.mxu0 0.0
        %756 = vmatprep.mubr.f32.mxu0 0.0
        %757 = vmatmul.mubr.f32.gmra.mxu0 %v637
        %v758 = vpop.f32.mrf.mxu0
        %v759 = vadd.f32 %v690, %v758
        %v760 = vpop.f32.mrf.mxu0
        %761 = vmatprep.mubr.f32.mxu0 0.0
        %762 = vmatmul.mubr.f32.gmra.mxu0 %v638
        %v763 = vpop.f32.mrf.mxu0
        %v764 = vadd.f32 %v690, %v763
        %v765 = vpop.f32.mrf.mxu0
        %766 = vmatprep.mubr.f32.mxu0 0.0
        %767 = vmatmul.mubr.f32.gmra.mxu0 %v639
        %v768 = vpop.f32.mrf.mxu0
        %v769 = vadd.f32 %v690, %v768
        %v770 = vpop.f32.mrf.mxu0
        %771 = vmatprep.mubr.f32.mxu0 0.0
        %772 = vmatmul.mubr.f32.gmra.mxu0 %v640
        %v773 = vpop.f32.mrf.mxu0
        %v774 = vadd.f32 %v690, %v773
        %v775 = vpop.f32.mrf.mxu0
        %776 = vmatprep.mubr.f32.mxu0 0.0
        %777 = vmatmul.mubr.f32.gmra.mxu0 %v641
        %v778 = vpop.f32.mrf.mxu0
        %v779 = vadd.f32 %v690, %v778
        %v780 = vpop.f32.mrf.mxu0
        %781 = vmatprep.mubr.f32.mxu0 0.0
        %782 = vmatmul.mubr.f32.gmra.mxu0 %v642
        %v783 = vpop.f32.mrf.mxu0
        %v784 = vadd.f32 %v690, %v783
        %v785 = vpop.f32.mrf.mxu0
        %786 = vmatprep.mubr.f32.mxu0 0.0
        %787 = vmatmul.mubr.f32.gmra.mxu0 %v643
        %v788 = vpop.f32.mrf.mxu0
        %v789 = vadd.f32 %v690, %v788
        %v790 = vpop.f32.mrf.mxu0
        %791 = vmatprep.mubr.f32.mxu0 0.0
        %792 = vmatmul.mubr.f32.gmra.mxu0 %v644
        %v793 = vpop.f32.mrf.mxu0
        %v794 = vadd.f32 %v690, %v793
        %v795 = vpop.f32.mrf.mxu0
        %796 = vmatprep.mubr.f32.mxu0 0.0
        %797 = vmatmul.mubr.f32.gmra.mxu0 %v645
        %v798 = vpop.f32.mrf.mxu0
        %v799 = vadd.f32 %v690, %v798
        %v800 = vpop.f32.mrf.mxu0
        %801 = vmatprep.mubr.f32.mxu0 0.0
        %802 = vmatmul.mubr.f32.gmra.mxu0 %v646
        %v803 = vpop.f32.mrf.mxu0
        %v804 = vadd.f32 %v690, %v803
        %v805 = vpop.f32.mrf.mxu0
        %806 = vmatprep.mubr.f32.mxu0 0.0
        %807 = vmatmul.mubr.f32.gmra.mxu0 %v647
        %v808 = vpop.f32.mrf.mxu0
        %v809 = vadd.f32 %v690, %v808
        %v810 = vpop.f32.mrf.mxu0
        %811 = vmatprep.mubr.f32.mxu0 0.0
        %812 = vmatmul.mubr.f32.gmra.mxu0 %v648
        %v813 = vpop.f32.mrf.mxu0
        %v814 = vadd.f32 %v690, %v813
        %v815 = vpop.f32.mrf.mxu0
        %816 = vmatprep.mubr.f32.mxu0 0.0
        %817 = vmatmul.mubr.f32.gmra.mxu0 %v649
        %v818 = vpop.f32.mrf.mxu0
        %v819 = vadd.f32 %v690, %v818
        %v820 = vpop.f32.mrf.mxu0
        %821 = vmatprep.mubr.f32.mxu0 0.0
        %822 = vmatmul.mubr.f32.gmra.mxu0 %v650
        %v823 = vpop.f32.mrf.mxu0
        %v824 = vadd.f32 %v690, %v823
        %v825 = vpop.f32.mrf.mxu0
        %826 = vmatprep.mubr.f32.mxu0 0.0
        %827 = vmatmul.mubr.f32.gmra.mxu0 %v651
        %v828 = vpop.f32.mrf.mxu0
        %v829 = vadd.f32 %v690, %v828
        %v830 = vpop.f32.mrf.mxu0
        %831 = vmatprep.mubr.f32.mxu0 0.0
        %832 = vmatmul.mubr.f32.gmra.mxu0 %v652
        %v833 = vpop.f32.mrf.mxu0
        %v834 = vadd.f32 %v690, %v833
        %v835 = vpop.f32.mrf.mxu0
        %836 = vmatprep.mubr.f32.mxu0 0.0
        %837 = vmatmul.mubr.f32.gmra.mxu0 %v653
        %v838 = vpop.f32.mrf.mxu0
        %v839 = vadd.f32 %v690, %v838
        %v840 = vpop.f32.mrf.mxu0
        %841 = vmatprep.mubr.f32.mxu0 0.0
        %842 = vmatmul.mubr.f32.gmra.mxu0 %v654
        %v843 = vpop.f32.mrf.mxu0
        %v844 = vadd.f32 %v690, %v843
        %v845 = vpop.f32.mrf.mxu0
        %846 = vmatprep.mubr.f32.mxu0 0.0
        %847 = vmatmul.mubr.f32.gmra.mxu0 %v655
        %v848 = vpop.f32.mrf.mxu0
        %v849 = vadd.f32 %v690, %v848
        %v850 = vpop.f32.mrf.mxu0
        %851 = vmatprep.mubr.f32.mxu0 0.0
        %852 = vmatmul.mubr.f32.gmra.mxu0 %v656
        %v853 = vpop.f32.mrf.mxu0
        %v854 = vadd.f32 %v690, %v853
        %v855 = vpop.f32.mrf.mxu0
        %856 = vmatprep.mubr.f32.mxu0 0.0
        %857 = vmatmul.mubr.f32.gmra.mxu0 %v657
        %v858 = vpop.f32.mrf.mxu0
        %v859 = vadd.f32 %v690, %v858
        %v860 = vpop.f32.mrf.mxu0
        %861 = vmatprep.mubr.f32.mxu0 0.0
        %862 = vmatmul.mubr.f32.gmra.mxu0 %v658
        %v863 = vpop.f32.mrf.mxu0
        %v864 = vadd.f32 %v690, %v863
        %v865 = vpop.f32.mrf.mxu0
        %866 = vmatprep.mubr.f32.mxu0 0.0
        %867 = vmatmul.mubr.f32.gmra.mxu0 %v659
        %v868 = vpop.f32.mrf.mxu0
        %v869 = vadd.f32 %v690, %v868
        %v870 = vpop.f32.mrf.mxu0
        %871 = vmatprep.mubr.f32.mxu0 0.0
        %872 = vmatmul.mubr.f32.gmra.mxu0 %v660
        %v873 = vpop.f32.mrf.mxu0
        %v874 = vadd.f32 %v690, %v873
        %v875 = vpop.f32.mrf.mxu0
        %876 = vmatprep.mubr.f32.mxu0 0.0
        %877 = vmatmul.mubr.f32.gmra.mxu0 %v661
        %v878 = vpop.f32.mrf.mxu0
        %v879 = vadd.f32 %v690, %v878
        %v880 = vpop.f32.mrf.mxu0
        %881 = vmatprep.mubr.f32.mxu0 0.0
        %882 = vmatmul.mubr.f32.gmra.mxu0 %v662
        %v883 = vpop.f32.mrf.mxu0
        %v884 = vadd.f32 %v690, %v883
        %v885 = vpop.f32.mrf.mxu0
        %886 = vmatprep.mubr.f32.mxu0 0.0
        %887 = vmatmul.mubr.f32.gmra.mxu0 %v663
        %v888 = vpop.f32.mrf.mxu0
        %v889 = vadd.f32 %v690, %v888
        %v890 = vpop.f32.mrf.mxu0
        %891 = vmatprep.mubr.f32.mxu0 0.0
        %892 = vmatmul.mubr.f32.gmra.mxu0 %v664
        %v893 = vpop.f32.mrf.mxu0
        %v894 = vadd.f32 %v690, %v893
        %v895 = vpop.f32.mrf.mxu0
        %896 = vmatprep.mubr.f32.mxu0 0.0
        %897 = vmatmul.mubr.f32.gmra.mxu0 %v665
        %v898 = vpop.f32.mrf.mxu0
        %v899 = vadd.f32 %v690, %v898
        %v900 = vpop.f32.mrf.mxu0
        %901 = vmatprep.mubr.f32.mxu0 0.0
        %902 = vmatmul.mubr.f32.gmra.mxu0 %v666
        %v903 = vpop.f32.mrf.mxu0
        %v904 = vadd.f32 %v690, %v903
        %v905 = vpop.f32.mrf.mxu0
        %906 = vmatprep.mubr.f32.mxu0 0.0
        %907 = vmatmul.mubr.f32.gmra.mxu0 %v667
        %v908 = vpop.f32.mrf.mxu0
        %v909 = vadd.f32 %v690, %v908
        %v910 = vpop.f32.mrf.mxu0
        %911 = vmatprep.mubr.f32.mxu0 0.0
        %912 = vmatmul.mubr.f32.gmra.mxu0 %v668
        %v913 = vpop.f32.mrf.mxu0
        %v914 = vadd.f32 %v690, %v913
        %v915 = vpop.f32.mrf.mxu0
        %916 = vdwg.mxu0
        %v917 = vmax.f32 %v759, 0.0
        %v918 = vmax.f32 %v764, 0.0
        %v919 = vmax.f32 %v769, 0.0
        %v920 = vmax.f32 %v774, 0.0
        %v921 = vmax.f32 %v779, 0.0
        %v922 = vmax.f32 %v784, 0.0
        %v923 = vmax.f32 %v789, 0.0
        %v924 = vmax.f32 %v794, 0.0
        %v925 = vmax.f32 %v799, 0.0
        %v926 = vmax.f32 %v804, 0.0
        %v927 = vmax.f32 %v809, 0.0
        %v928 = vmax.f32 %v814, 0.0
        %v929 = vmax.f32 %v819, 0.0
        %v930 = vmax.f32 %v824, 0.0
        %v931 = vmax.f32 %v829, 0.0
        %v932 = vmax.f32 %v834, 0.0
        %v933 = vmax.f32 %v839, 0.0
        %v934 = vmax.f32 %v844, 0.0
        %v935 = vmax.f32 %v849, 0.0
        %v936 = vmax.f32 %v854, 0.0
        %v937 = vmax.f32 %v859, 0.0
        %v938 = vmax.f32 %v864, 0.0
        %v939 = vmax.f32 %v869, 0.0
        %v940 = vmax.f32 %v874, 0.0
        %v941 = vmax.f32 %v879, 0.0
        %v942 = vmax.f32 %v884, 0.0
        %v943 = vmax.f32 %v889, 0.0
        %v944 = vmax.f32 %v894, 0.0
        %v945 = vmax.f32 %v899, 0.0
        %v946 = vmax.f32 %v904, 0.0
        %v947 = vmax.f32 %v909, 0.0
        %v948 = vmax.f32 %v914, 0.0
        %v949 = vld [vmem:[#allocation8] sm:$0xff]
        %v950 = vld [vmem:[#allocation8 + $0x8] sm:$0xff]
        %v951 = vld [vmem:[#allocation8 + $0x10] sm:$0xff]
        %v952 = vld [vmem:[#allocation8 + $0x18] sm:$0xff]
        %v953 = vld [vmem:[#allocation8 + $0x20] sm:$0xff]
        %v954 = vld [vmem:[#allocation8 + $0x28] sm:$0xff]
        %v955 = vld [vmem:[#allocation8 + $0x30] sm:$0xff]
        %v956 = vld [vmem:[#allocation8 + $0x38] sm:$0xff]
        %v957 = vld [vmem:[#allocation8 + $0x40] sm:$0xff]
        %v958 = vld [vmem:[#allocation8 + $0x48] sm:$0xff]
        %v959 = vld [vmem:[#allocation8 + $0x50] sm:$0xff]
        %v960 = vld [vmem:[#allocation8 + $0x58] sm:$0xff]
        %v961 = vld [vmem:[#allocation8 + $0x60] sm:$0xff]
        %v962 = vld [vmem:[#allocation8 + $0x68] sm:$0xff]
        %v963 = vld [vmem:[#allocation8 + $0x70] sm:$0xff]
        %v964 = vld [vmem:[#allocation8 + $0x78] sm:$0xff]
        %v965 = vld [vmem:[%s6] sm:$0x1]
        %v967 = vlaneseq
        %v968 = vshrl.u32 %v967, 7
        %v969 = vsub.s32 0, %v968
        %v970 = vrot.slane %v965, %v969
        %972 = vmatprep.subr.mxu0 0.0
        %973 = vmatpush1.msra.mxu0 %v964
        %974 = vmatprep.subr.mxu0 0.0
        %975 = vmatpush1.msra.mxu0 %v963
        %976 = vmatprep.subr.mxu0 0.0
        %977 = vmatpush1.msra.mxu0 %v962
        %978 = vmatprep.subr.mxu0 0.0
        %979 = vmatpush1.msra.mxu0 %v961
        %980 = vmatprep.subr.mxu0 0.0
        %981 = vmatpush1.msra.mxu0 %v960
        %982 = vmatprep.subr.mxu0 0.0
        %983 = vmatpush1.msra.mxu0 %v959
        %984 = vmatprep.subr.mxu0 0.0
        %985 = vmatpush1.msra.mxu0 %v958
        %986 = vmatprep.subr.mxu0 0.0
        %987 = vmatpush1.msra.mxu0 %v957
        %988 = vmatprep.subr.mxu0 0.0
        %989 = vmatpush1.msra.mxu0 %v956
        %990 = vmatprep.subr.mxu0 0.0
        %991 = vmatpush1.msra.mxu0 %v955
        %992 = vmatprep.subr.mxu0 0.0
        %993 = vmatpush1.msra.mxu0 %v954
        %994 = vmatprep.subr.mxu0 0.0
        %995 = vmatpush1.msra.mxu0 %v953
        %996 = vmatprep.subr.mxu0 0.0
        %997 = vmatpush1.msra.mxu0 %v952
        %998 = vmatprep.subr.mxu0 0.0
        %999 = vmatpush1.msra.mxu0 %v951
        %1000 = vmatprep.subr.mxu0 0.0
        %1001 = vmatpush1.msra.mxu0 %v950
        %1002 = vmatprep.subr.mxu0 0.0
        %1003 = vmatpush1.msra.mxu0 %v949
        %1004 = vmatprep.subr.mxu0 0.0
        %1005 = vmatpush2.msra.mxu0 0.0
        %1006 = vmatprep.subr.mxu0 0.0
        %1007 = vmatpush2.msra.mxu0 0.0
        %1008 = vmatprep.subr.mxu0 0.0
        %1009 = vmatpush2.msra.mxu0 0.0
        %1010 = vmatprep.subr.mxu0 0.0
        %1011 = vmatpush2.msra.mxu0 0.0
        %1012 = vmatprep.subr.mxu0 0.0
        %1013 = vmatpush2.msra.mxu0 0.0
        %1014 = vmatprep.subr.mxu0 0.0
        %1015 = vmatpush2.msra.mxu0 0.0
        %1016 = vmatprep.subr.mxu0 0.0
        %1017 = vmatpush2.msra.mxu0 0.0
        %1018 = vmatprep.subr.mxu0 0.0
        %1019 = vmatpush2.msra.mxu0 0.0
        %1020 = vmatprep.subr.mxu0 0.0
        %1021 = vmatpush2.msra.mxu0 0.0
        %1022 = vmatprep.subr.mxu0 0.0
        %1023 = vmatpush2.msra.mxu0 0.0
        %1024 = vmatprep.subr.mxu0 0.0
        %1025 = vmatpush2.msra.mxu0 0.0
        %1026 = vmatprep.subr.mxu0 0.0
        %1027 = vmatpush2.msra.mxu0 0.0
        %1028 = vmatprep.subr.mxu0 0.0
        %1029 = vmatpush2.msra.mxu0 0.0
        %1030 = vmatprep.subr.mxu0 0.0
        %1031 = vmatpush2.msra.mxu0 0.0
        %1032 = vmatprep.subr.mxu0 0.0
        %1033 = vmatpush2.msra.mxu0 0.0
        %1034 = vmatprep.subr.mxu0 0.0
        %1035 = vmatpush2.msra.mxu0 0.0
        %1036 = vmatprep.mubr.f32.mxu0 0.0
        %1037 = vmatmul.mubr.f32.gmra.mxu0 %v917
        %v1038 = vpop.f32.mrf.mxu0
        %v1039 = vadd.f32 %v970, %v1038
        %v1040 = vpop.f32.mrf.mxu0
        %1041 = vmatprep.mubr.f32.mxu0 0.0
        %1042 = vmatmul.mubr.f32.gmra.mxu0 %v918
        %v1043 = vpop.f32.mrf.mxu0
        %v1044 = vadd.f32 %v970, %v1043
        %v1045 = vpop.f32.mrf.mxu0
        %1046 = vmatprep.mubr.f32.mxu0 0.0
        %1047 = vmatmul.mubr.f32.gmra.mxu0 %v919
        %v1048 = vpop.f32.mrf.mxu0
        %v1049 = vadd.f32 %v970, %v1048
        %v1050 = vpop.f32.mrf.mxu0
        %1051 = vmatprep.mubr.f32.mxu0 0.0
        %1052 = vmatmul.mubr.f32.gmra.mxu0 %v920
        %v1053 = vpop.f32.mrf.mxu0
        %v1054 = vadd.f32 %v970, %v1053
        %v1055 = vpop.f32.mrf.mxu0
        %1056 = vmatprep.mubr.f32.mxu0 0.0
        %1057 = vmatmul.mubr.f32.gmra.mxu0 %v921
        %v1058 = vpop.f32.mrf.mxu0
        %v1059 = vadd.f32 %v970, %v1058
        %v1060 = vpop.f32.mrf.mxu0
        %1061 = vmatprep.mubr.f32.mxu0 0.0
        %1062 = vmatmul.mubr.f32.gmra.mxu0 %v922
        %v1063 = vpop.f32.mrf.mxu0
        %v1064 = vadd.f32 %v970, %v1063
        %v1065 = vpop.f32.mrf.mxu0
        %1066 = vmatprep.mubr.f32.mxu0 0.0
        %1067 = vmatmul.mubr.f32.gmra.mxu0 %v923
        %v1068 = vpop.f32.mrf.mxu0
        %v1069 = vadd.f32 %v970, %v1068
        %v1070 = vpop.f32.mrf.mxu0
        %1071 = vmatprep.mubr.f32.mxu0 0.0
        %1072 = vmatmul.mubr.f32.gmra.mxu0 %v924
        %v1073 = vpop.f32.mrf.mxu0
        %v1074 = vadd.f32 %v970, %v1073
        %v1075 = vpop.f32.mrf.mxu0
        %1076 = vmatprep.mubr.f32.mxu0 0.0
        %1077 = vmatmul.mubr.f32.gmra.mxu0 %v925
        %v1078 = vpop.f32.mrf.mxu0
        %v1079 = vadd.f32 %v970, %v1078
        %v1080 = vpop.f32.mrf.mxu0
        %1081 = vmatprep.mubr.f32.mxu0 0.0
        %1082 = vmatmul.mubr.f32.gmra.mxu0 %v926
        %v1083 = vpop.f32.mrf.mxu0
        %v1084 = vadd.f32 %v970, %v1083
        %v1085 = vpop.f32.mrf.mxu0
        %1086 = vmatprep.mubr.f32.mxu0 0.0
        %1087 = vmatmul.mubr.f32.gmra.mxu0 %v927
        %v1088 = vpop.f32.mrf.mxu0
        %v1089 = vadd.f32 %v970, %v1088
        %v1090 = vpop.f32.mrf.mxu0
        %1091 = vmatprep.mubr.f32.mxu0 0.0
        %1092 = vmatmul.mubr.f32.gmra.mxu0 %v928
        %v1093 = vpop.f32.mrf.mxu0
        %v1094 = vadd.f32 %v970, %v1093
        %v1095 = vpop.f32.mrf.mxu0
        %1096 = vmatprep.mubr.f32.mxu0 0.0
        %1097 = vmatmul.mubr.f32.gmra.mxu0 %v929
        %v1098 = vpop.f32.mrf.mxu0
        %v1099 = vadd.f32 %v970, %v1098
        %v1100 = vpop.f32.mrf.mxu0
        %1101 = vmatprep.mubr.f32.mxu0 0.0
        %1102 = vmatmul.mubr.f32.gmra.mxu0 %v930
        %v1103 = vpop.f32.mrf.mxu0
        %v1104 = vadd.f32 %v970, %v1103
        %v1105 = vpop.f32.mrf.mxu0
        %1106 = vmatprep.mubr.f32.mxu0 0.0
        %1107 = vmatmul.mubr.f32.gmra.mxu0 %v931
        %v1108 = vpop.f32.mrf.mxu0
        %v1109 = vadd.f32 %v970, %v1108
        %v1110 = vpop.f32.mrf.mxu0
        %1111 = vmatprep.mubr.f32.mxu0 0.0
        %1112 = vmatmul.mubr.f32.gmra.mxu0 %v932
        %v1113 = vpop.f32.mrf.mxu0
        %v1114 = vadd.f32 %v970, %v1113
        %v1115 = vpop.f32.mrf.mxu0
        %1116 = vmatprep.mubr.f32.mxu0 0.0
        %1117 = vmatmul.mubr.f32.gmra.mxu0 %v933
        %v1118 = vpop.f32.mrf.mxu0
        %v1119 = vadd.f32 %v970, %v1118
        %v1120 = vpop.f32.mrf.mxu0
        %1121 = vmatprep.mubr.f32.mxu0 0.0
        %1122 = vmatmul.mubr.f32.gmra.mxu0 %v934
        %v1123 = vpop.f32.mrf.mxu0
        %v1124 = vadd.f32 %v970, %v1123
        %v1125 = vpop.f32.mrf.mxu0
        %1126 = vmatprep.mubr.f32.mxu0 0.0
        %1127 = vmatmul.mubr.f32.gmra.mxu0 %v935
        %v1128 = vpop.f32.mrf.mxu0
        %v1129 = vadd.f32 %v970, %v1128
        %v1130 = vpop.f32.mrf.mxu0
        %1131 = vmatprep.mubr.f32.mxu0 0.0
        %1132 = vmatmul.mubr.f32.gmra.mxu0 %v936
        %v1133 = vpop.f32.mrf.mxu0
        %v1134 = vadd.f32 %v970, %v1133
        %v1135 = vpop.f32.mrf.mxu0
        %1136 = vmatprep.mubr.f32.mxu0 0.0
        %1137 = vmatmul.mubr.f32.gmra.mxu0 %v937
        %v1138 = vpop.f32.mrf.mxu0
        %v1139 = vadd.f32 %v970, %v1138
        %v1140 = vpop.f32.mrf.mxu0
        %1141 = vmatprep.mubr.f32.mxu0 0.0
        %1142 = vmatmul.mubr.f32.gmra.mxu0 %v938
        %v1143 = vpop.f32.mrf.mxu0
        %v1144 = vadd.f32 %v970, %v1143
        %v1145 = vpop.f32.mrf.mxu0
        %1146 = vmatprep.mubr.f32.mxu0 0.0
        %1147 = vmatmul.mubr.f32.gmra.mxu0 %v939
        %v1148 = vpop.f32.mrf.mxu0
        %v1149 = vadd.f32 %v970, %v1148
        %v1150 = vpop.f32.mrf.mxu0
        %1151 = vmatprep.mubr.f32.mxu0 0.0
        %1152 = vmatmul.mubr.f32.gmra.mxu0 %v940
        %v1153 = vpop.f32.mrf.mxu0
        %v1154 = vadd.f32 %v970, %v1153
        %v1155 = vpop.f32.mrf.mxu0
        %1156 = vmatprep.mubr.f32.mxu0 0.0
        %1157 = vmatmul.mubr.f32.gmra.mxu0 %v941
        %v1158 = vpop.f32.mrf.mxu0
        %v1159 = vadd.f32 %v970, %v1158
        %v1160 = vpop.f32.mrf.mxu0
        %1161 = vmatprep.mubr.f32.mxu0 0.0
        %1162 = vmatmul.mubr.f32.gmra.mxu0 %v942
        %v1163 = vpop.f32.mrf.mxu0
        %v1164 = vadd.f32 %v970, %v1163
        %v1165 = vpop.f32.mrf.mxu0
        %1166 = vmatprep.mubr.f32.mxu0 0.0
        %1167 = vmatmul.mubr.f32.gmra.mxu0 %v943
        %v1168 = vpop.f32.mrf.mxu0
        %v1169 = vadd.f32 %v970, %v1168
        %v1170 = vpop.f32.mrf.mxu0
        %1171 = vmatprep.mubr.f32.mxu0 0.0
        %1172 = vmatmul.mubr.f32.gmra.mxu0 %v944
        %v1173 = vpop.f32.mrf.mxu0
        %v1174 = vadd.f32 %v970, %v1173
        %v1175 = vpop.f32.mrf.mxu0
        %1176 = vmatprep.mubr.f32.mxu0 0.0
        %1177 = vmatmul.mubr.f32.gmra.mxu0 %v945
        %v1178 = vpop.f32.mrf.mxu0
        %v1179 = vadd.f32 %v970, %v1178
        %v1180 = vpop.f32.mrf.mxu0
        %1181 = vmatprep.mubr.f32.mxu0 0.0
        %1182 = vmatmul.mubr.f32.gmra.mxu0 %v946
        %v1183 = vpop.f32.mrf.mxu0
        %v1184 = vadd.f32 %v970, %v1183
        %v1185 = vpop.f32.mrf.mxu0
        %1186 = vmatprep.mubr.f32.mxu0 0.0
        %1187 = vmatmul.mubr.f32.gmra.mxu0 %v947
        %v1188 = vpop.f32.mrf.mxu0
        %v1189 = vadd.f32 %v970, %v1188
        %v1190 = vpop.f32.mrf.mxu0
        %1191 = vmatprep.mubr.f32.mxu0 0.0
        %1192 = vmatmul.mubr.f32.gmra.mxu0 %v948
        %v1193 = vpop.f32.mrf.mxu0
        %v1194 = vadd.f32 %v970, %v1193
        %v1195 = vpop.f32.mrf.mxu0
        %1196 = vdwg.mxu0
        %1197 = vst [vmem:[%s346] sm:$0xff] %v1039
        %1198 = vst [vmem:[%s346 + $0x8] sm:$0xff] %v1044
        %1199 = vst [vmem:[%s346 + $0x10] sm:$0xff] %v1049
        %1200 = vst [vmem:[%s346 + $0x18] sm:$0xff] %v1054
        %1201 = vst [vmem:[%s346 + $0x20] sm:$0xff] %v1059
        %1202 = vst [vmem:[%s346 + $0x28] sm:$0xff] %v1064
        %1203 = vst [vmem:[%s346 + $0x30] sm:$0xff] %v1069
        %1204 = vst [vmem:[%s346 + $0x38] sm:$0xff] %v1074
        %1205 = vst [vmem:[%s346 + $0x40] sm:$0xff] %v1079
        %1206 = vst [vmem:[%s346 + $0x48] sm:$0xff] %v1084
        %1207 = vst [vmem:[%s346 + $0x50] sm:$0xff] %v1089
        %1208 = vst [vmem:[%s346 + $0x58] sm:$0xff] %v1094
        %1209 = vst [vmem:[%s346 + $0x60] sm:$0xff] %v1099
        %1210 = vst [vmem:[%s346 + $0x68] sm:$0xff] %v1104
        %1211 = vst [vmem:[%s346 + $0x70] sm:$0xff] %v1109
        %1212 = vst [vmem:[%s346 + $0x78] sm:$0xff] %v1114
        %1213 = vst [vmem:[%s346 + $0x80] sm:$0xff] %v1119
        %1214 = vst [vmem:[%s346 + $0x88] sm:$0xff] %v1124
        %1215 = vst [vmem:[%s346 + $0x90] sm:$0xff] %v1129
        %1216 = vst [vmem:[%s346 + $0x98] sm:$0xff] %v1134
        %1217 = vst [vmem:[%s346 + $0xa0] sm:$0xff] %v1139
        %1218 = vst [vmem:[%s346 + $0xa8] sm:$0xff] %v1144
        %1219 = vst [vmem:[%s346 + $0xb0] sm:$0xff] %v1149
        %1220 = vst [vmem:[%s346 + $0xb8] sm:$0xff] %v1154
        %1221 = vst [vmem:[%s346 + $0xc0] sm:$0xff] %v1159
        %1222 = vst [vmem:[%s346 + $0xc8] sm:$0xff] %v1164
        %1223 = vst [vmem:[%s346 + $0xd0] sm:$0xff] %v1169
        %1224 = vst [vmem:[%s346 + $0xd8] sm:$0xff] %v1174
        %1225 = vst [vmem:[%s346 + $0xe0] sm:$0xff] %v1179
        %1226 = vst [vmem:[%s346 + $0xe8] sm:$0xff] %v1184
        %1227 = vst [vmem:[%s346 + $0xf0] sm:$0xff] %v1189
        %1228 = vst [vmem:[%s346 + $0xf8] sm:$0xff] %v1194
        %s1229 = sand.u32 %s186, 1
        %s1230 = scalar_lea.sflag [#allocation4], %s1229
        %s1231 = sand.u32 %s186, 1
        %s1232 = smul.addr %s1231, 256
        %s1233 = scalar_lea.vmem [#allocation10], %s1232
        // Predicated region
        $region65: #{tpu_custom_call.1} parent=47 // pred_check
          %p1234 = pneg %p196
        $region66: #{tpu_custom_call.1} parent=47 // pred_check_branch
          %1236 = sbr.rel (%p1234) target = $region68
        $region67: #{tpu_custom_call.1} parent=47 // pred_region
          %s1237 = smul.u32 32, %s26
          %s1238 = ssub.s32 38, %s1237
          %p1239 = scmp.lt.s32.totalorder %s1238, 32
          %s1240 = scalar_select %p1239, %s1238, 32
          %s1241 = smul.u32 128, %s1240
          %s1243 = ssub.s32 4096, %s1241
          %1244 = vsyncadd %s1230, %s1243
          %p1245 = scmp.ne.s32.totalorder 0, %s1241
          %s1246 = smul.addr %s1237, 128
          %s1247 = scalar_lea.hbm %s7, %s1246
          %s1248 = smul.u32 8, %s1240
          %s1249 = sshll.u32 %s1233, 4
          %s1250 = int_to_ptr.vmem [resolvable:$true] %s1249
          %s1251 = sshll.u32 %s1248, 4
          %1255 = dma.vmem_to_hbm [thread:$0]  (%p1245), %s1250, %s1251, %s1247, %s1230, 128, 128, 8
        $region68: #{tpu_custom_call.1} parent=47 // pred_fallthru
          _
      $region48: #{tpu_custom_call.1} parent=5 // pred_fallthru
        _
      %p1256 = scmp.le.s32.totalorder 2, %s21
      // Predicated region
      $region69: #{tpu_custom_call.1} parent=5 // pred_check
        %p1257 = pneg %p1256
      $region70: #{tpu_custom_call.1} parent=5 // pred_check_branch
        %1259 = sbr.rel (%p1257) target = $region72
      $region71: #{tpu_custom_call.1} parent=5 // pred_region
        %s1260 = ssub.s32 %s21, 2
        // Predicated region
        $region73: #{tpu_custom_call.1} parent=71 // pred_check
          %p1261 = pneg %p202
        $region74: #{tpu_custom_call.1} parent=71 // pred_check_branch
          %1263 = sbr.rel (%p1261) target = $region76
        $region75: #{tpu_custom_call.1} parent=71 // pred_region
          %s1264 = sand.u32 %s187, 1
          %s1265 = scalar_lea.sflag [#allocation4], %s1264
          %s1266 = sand.u32 %s187, 1
          %s1267 = smul.addr %s1266, 256
          %s1268 = scalar_lea.vmem [#allocation10], %s1267
          %1269 = dma.done %s1265, 4096
        $region76: #{tpu_custom_call.1} parent=71 // pred_fallthru
          _
      $region72: #{tpu_custom_call.1} parent=5 // pred_fallthru
        _
    $region6: #{tpu_custom_call.1} parent=1 // loop_footer
      %s25 = sadd.s32 1, %s21
    $region7: #{tpu_custom_call.1} parent=1 // loop_footer_branch
      %20 = sbr.rel target = $region3
    $region8: #{tpu_custom_call.1} parent=1 // loop_exit
      _
    %1270 = vsyncpa [#allocation3], 1
    %s1271 = scalar_lea.sflag [#allocation3], 1
    %1272 = vsyncpa %s1271, 1
    %1273 = vsyncpa [#allocation6], 1
    %1274 = vsyncpa [#allocation9], 1
    %1275 = vsyncpa [#allocation4], 1
    %s1276 = scalar_lea.sflag [#allocation4], 1
    %1277 = vsyncpa %s1276, 1

</llo_original>
